<compile_context>
chip_gen: v7x
topology: tpu7x:2x2x1
jax: 0.10.0
libtpu: 0.0.40
codegen_flags: <defaults>
</compile_context>

<pallas_src>
import functools

import jax
import jax.numpy as jnp
from jax import lax
from jax.experimental import pallas as pl
from jax.experimental.pallas import tpu as pltpu

# ---------------- constants (NDCG_M.__init__ / allRank defaults) ----------------
PADDED_Y_VALUE = -1.0
DEFAULT_EPS = 1e-10

QUERY_NUM = 2
LONGEST_QUERY_SIZE = 8
ENABLE_U = True            # implemented code path
GAMMA = 0.1
TOPK = 3                   # > 0 -> 'theo' branch
BETA = 0.9
ETA = 0.01
TAU_1 = 0.001
TAU_2 = 0.0001
SIGMOID_ALPHA = 2.0
C_SIGMOID = 2.0
LN2 = 0.6931471805599453
INV_LN2 = 1.4426950408889634

Q2 = QUERY_NUM + 2            # rows of u_warmup / length of lambda_q, v_q, s_q
L2 = LONGEST_QUERY_SIZE + 2   # cols of u_warmup

SLAB_C = 128                  # lane-dense slab width (full vreg lane width)


def _round8(n):
    return ((n + 7) // 8) * 8


def _fiota(shape, dim):
    # int32 iota (well supported on TPU) converted to f32 for exact small-int compares
    return lax.broadcasted_iota(jnp.int32, shape, dim).astype(jnp.float32)


def _sigmoid(x):
    # exact: sigmoid(x) = 0.5*(tanh(x/2)+1)  -> one EUP op (tanh), no reciprocal
    return 0.5 * (jnp.tanh(0.5 * x) + 1.0)


# ------------------------------- fused Pallas kernel ----------------------------------
def _ndcg_m_kernel(in_ref, out_ref, *, B, S):
    """Single fused forward + persistent-state update.

    Input slab rows (f32, width SLAB_C):
      [0, B)    : y_pred | y_true | indices+1 | qid+1 | num_item | num_pos/(idcg+eps)
                  at cols [0,S) [S,2S) [2S,3S) [3S] [3S+1] [3S+2]
      [B, B+Q2) : u_warmup at cols [0, L2)
      [B+Q2]    : lambda_q | v_q | s_q at cols [0,Q2) [Q2,2Q2) [2Q2,3Q2)
    Output slab rows:
      [0]       : loss at col 0
      [1, 1+Q2) : new u_warmup at cols [0, L2)
      [1+Q2]    : new lambda_q | v_q | s_q at cols [0,Q2) [Q2,2Q2) [2Q2,3Q2)
    """
    yp = in_ref[0:B, 0:S]                      # raw predictions
    yt = in_ref[0:B, S:2 * S]                  # labels, padded with -1
    jv = in_ref[0:B, 2 * S:3 * S]              # indices + 1 (0 at padded positions)
    qv = in_ref[0:B, 3 * S:3 * S + 1]          # qid + 1 (constant per slate row)
    ni = in_ref[0:B, 3 * S + 1:3 * S + 2]      # num_item
    w = in_ref[0:B, 3 * S + 2:3 * S + 3]       # num_pos / (ideal_dcg + eps)
    u_old = in_ref[B:B + Q2, 0:L2]             # persistent u_warmup
    lam_vec = in_ref[B + Q2:B + Q2 + 1, 0:Q2]  # lambda_q
    v_vec = in_ref[B + Q2:B + Q2 + 1, Q2:2 * Q2]
    s_vec = in_ref[B + Q2:B + Q2 + 1, 2 * Q2:3 * Q2]

    valid = (yt != PADDED_Y_VALUE).astype(jnp.float32)            # (B,S)
    ninf = jnp.sum(valid, axis=-1, keepdims=True)                 # (B,1)
    # exact division; fully padded rows are degenerate (reference -> NaN), guard instead
    inv_ninf = 1.0 / jnp.maximum(ninf, 1.0)

    # --- pairwise squared-hinge surrogate g ------------------------------------------
    # TODO(synk): for production slates (S >> 128) block this over j with a grid
    # ("parallel" batch axis first for v7x's 2 TCs, j-reduction axis last & "arbitrary"),
    # accumulate in a VMEM scratch and size tiles for v7x's 64 MiB VMEM, not 128 MiB.
    diffs = yp[:, None, :] - yp[:, :, None]                       # (B,S,S)
    pm = valid[:, None, :] * valid[:, :, None]                    # pairwise finite mask
    hinge = jnp.maximum(diffs + 1.0, 0.0)
    g = jnp.sum(pm * hinge * hinge, axis=-1) * inv_ninf + DEFAULT_EPS   # (B,S)

    # --- gather persistent state for the batch queries (iota one-hot selects) --------
    q_onehot = (_fiota((B, Q2), 1) == qv).astype(jnp.float32)     # (B,Q2)
    lam_row = jnp.sum(q_onehot * lam_vec, axis=-1, keepdims=True)  # (B,1) old lambda_q
    v_row = jnp.sum(q_onehot * v_vec, axis=-1, keepdims=True)      # (B,1) old v_q
    s_row = jnp.sum(q_onehot * s_vec, axis=-1, keepdims=True)      # (B,1) old s_q
    u_rows = jnp.sum(q_onehot[:, :, None] * u_old[None, :, :], axis=1)  # (B,L2)

    # per-element gather u_warmup[qid+1, indices+1]
    j_onehot = (_fiota((B, S, L2), 2) == jv[:, :, None]).astype(jnp.float32)  # (B,S,L2)
    u_gath = jnp.sum(j_onehot * u_rows[:, None, :], axis=-1)                  # (B,S)

    # u_warmup EMA value (the reference scatters this and re-reads it as g_u)
    g_u = (1.0 - GAMMA) * u_gath + GAMMA * g

    # gains 2**clamp(y_true, 0) - 1 ; padded labels (-1) clamp to 0 -> G = 0
    G = jnp.exp(jnp.maximum(yt, 0.0) * LN2) - 1.0

    pld = jnp.where(valid > 0.0, yp - lam_row, 0.0)               # pred_lambda_diffs
    sig1 = _sigmoid(pld * (1.0 / TAU_1))
    sig_a = _sigmoid(pld * SIGMOID_ALPHA)

    grad_lam = (float(TOPK) / ni + TAU_2 * lam_row
                - jnp.sum(valid * sig1, axis=-1, keepdims=True) * inv_ninf)    # (B,1)

    two_nig = 2.0 + ni * g_u
    log2t = jnp.log(two_nig) * INV_LN2
    inv_log2t = 1.0 / log2t                                       # reused below
    nabla_f_g = (G * ni) * inv_log2t * inv_log2t / (two_nig * LN2)
    nabla_f_g = nabla_f_g * (C_SIGMOID * sig_a)                   # topk_version='theo'
    weight_1 = C_SIGMOID * sig_a * (1.0 - sig_a)

    yp0 = yp * valid                                              # y_pred[padded] = 0
    temp = sig1 * (1.0 - sig1) * (1.0 / TAU_1)
    l_hess = TAU_2 + jnp.sum(valid * temp, axis=-1, keepdims=True) * inv_ninf  # (B,1)
    s_new_row = BETA * l_hess + (1.0 - BETA) * s_row              # updated s_q
    hess = jnp.sum(valid * temp * yp0, axis=-1, keepdims=True) * inv_ninf / s_new_row

    f_g_u = -G * inv_log2t
    inner = nabla_f_g * g + weight_1 * f_g_u * (yp0 - hess)
    # padded entries of `inner` are exactly 0 (G == 0 there): mean over padded length S
    # matches the reference's torch.mean over the padded tensor.
    row_mean = jnp.mean(inner, axis=-1, keepdims=True)            # (B,1)

    # torch quirk: (num_pos[:,None] * row / idcg[:,None]).mean() builds a (B,B) outer
    # product; its global mean equals mean(num_pos/idcg) * mean(row)  (exact identity).
    loss_11 = jnp.mean(w, keepdims=True) * jnp.mean(row_mean, keepdims=True)   # (1,1)

    # --- in-kernel persistent-state updates -------------------------------------------
    v_new_row = BETA * grad_lam + (1.0 - BETA) * v_row
    lam_new_row = lam_row - ETA * v_new_row

    # scatter u_warmup[qid+1, indices+1] = g_u ; column collisions only happen at j==0
    # (padded slots) where all colliding values are identical -> sum/count recovers it.
    scat_sum = jnp.sum(j_onehot * g_u[:, :, None], axis=1)        # (B,L2)
    counts = jnp.sum(j_onehot, axis=1)                            # (B,L2)
    scat_val = scat_sum / jnp.maximum(counts, 1.0)

    row_iota = _fiota((Q2, 1), 0)
    lane_q = _fiota((1, Q2), 1)
    u_new = u_old
    lam_out, v_out, s_out = lam_vec, v_vec, s_vec
    for b in range(B):   # ordered select chain == torch last-write-wins index semantics
        qb = qv[b:b + 1, :]                                       # (1,1)
        umask = (row_iota == qb) & (counts[b:b + 1, :] > 0.0)     # (Q2,L2)
        u_new = jnp.where(umask, scat_val[b:b + 1, :], u_new)
        qmask = lane_q == qb                                      # (1,Q2)
        lam_out = jnp.where(qmask, lam_new_row[b:b + 1, :], lam_out)
        v_out = jnp.where(qmask, v_new_row[b:b + 1, :], v_out)
        s_out = jnp.where(qmask, s_new_row[b:b + 1, :], s_out)

    # --- single lane-dense output slab (one DMA writeback) -----------------------------
    out_ref[...] = jnp.zeros_like(out_ref)
    out_ref[0:1, 0:1] = loss_11
    out_ref[1:1 + Q2, 0:L2] = u_new
    out_ref[1 + Q2:2 + Q2, 0:Q2] = lam_out
    out_ref[1 + Q2:2 + Q2, Q2:2 * Q2] = v_out
    out_ref[1 + Q2:2 + Q2, 2 * Q2:3 * Q2] = s_out


def _ndcg_m_call(slab, B, S, out_rows):
    kernel = functools.partial(_ndcg_m_kernel, B=B, S=S)
    # Single block, no grid: everything fits in one (8,128) tile.
    # TODO(synk): for large batches add a grid over >=8-row B-blocks with
    # dimension_semantics=("parallel", ..., "arbitrary") to shard across v7x's 2 TCs.
    return pl.pallas_call(
        kernel,
        out_shape=jax.ShapeDtypeStruct((out_rows, SLAB_C), jnp.float32),
        in_specs=[pl.BlockSpec(memory_space=pltpu.MemorySpace.VMEM)],
        out_specs=pl.BlockSpec(memory_space=pltpu.MemorySpace.VMEM),
    )(slab)


# ------------------------------- module glue -----------------------------------------
def init_state(query_num=QUERY_NUM, longest_query_size=LONGEST_QUERY_SIZE):
    return {
        "u_warmup": jnp.zeros((query_num + 2, longest_query_size + 2), jnp.float32),
        "lambda_q": jnp.zeros((query_num + 2,), jnp.float32),
        "v_q": jnp.zeros((query_num + 2,), jnp.float32),
        "s_q": jnp.zeros((query_num + 2,), jnp.float32),
    }


@jax.jit
def ndcg_m_forward(state, y_pred, y_true, qid, indices, num_pos, num_item, ideal_dcg):
    """Fused NDCG_M forward.  Returns (loss, new_state)."""
    B, S = y_pred.shape
    assert 3 * S + 3 <= SLAB_C and L2 <= SLAB_C and 3 * Q2 <= SLAB_C
    f32 = jnp.float32
    in_rows = _round8(B + Q2 + 1)
    out_rows = _round8(Q2 + 2)

    # ---- pack everything into ONE (in_rows, 128) f32 slab (fused by XLA) ------------
    jv = indices.astype(f32) + 1.0
    qvc = qid[:, 0:1].astype(f32) + 1.0    # NOTE: assumes qid constant per slate row
    nic = num_item.astype(f32)[:, None]
    wc = (num_pos.astype(f32) / (ideal_dcg.astype(f32) + DEFAULT_EPS))[:, None]
    batch_rows = jnp.concatenate(
        [y_pred.astype(f32), y_true.astype(f32), jv, qvc, nic, wc,
         jnp.zeros((B, SLAB_C - (3 * S + 3)), f32)], axis=1)
    u_rows = jnp.concatenate(
        [state["u_warmup"].astype(f32), jnp.zeros((Q2, SLAB_C - L2), f32)], axis=1)
    lvs_row = jnp.concatenate(
        [state["lambda_q"][None, :].astype(f32), state["v_q"][None, :].astype(f32),
         state["s_q"][None, :].astype(f32), jnp.zeros((1, SLAB_C - 3 * Q2), f32)],
        axis=1)
    pad_rows = jnp.zeros((in_rows - (B + Q2 + 1), SLAB_C), f32)
    slab = jnp.concatenate([batch_rows, u_rows, lvs_row, pad_rows], axis=0)

    out = _ndcg_m_call(slab, B, S, out_rows)

    loss = out[0, 0]
    new_state = {
        "u_warmup": out[1:1 + Q2, 0:L2],
        "lambda_q": out[1 + Q2, 0:Q2],
        "v_q": out[1 + Q2, Q2:2 * Q2],
        "s_q": out[1 + Q2, 2 * Q2:3 * Q2],
    }
    return loss, new_state


# ------------------------------------ demo --------------------------------------------
if __name__ == "__main__":
    B, S = QUERY_NUM, LONGEST_QUERY_SIZE
    key = jax.random.PRNGKey(0)
    y_pred = jax.random.normal(key, (B, S), dtype=jnp.float32)

    # relevance labels in {0..3}, padded with -1 (per docstring)
    y_true = jnp.array([[3., 2., 0., 1., 0., 2., -1., -1.],
                        [1., 0., 2., 3., 0., 1., 2., -1.]], dtype=jnp.float32)
    valid_b = y_true != PADDED_Y_VALUE
    qid = jnp.tile(jnp.arange(B, dtype=jnp.int32)[:, None], (1, S))
    indices = jnp.where(valid_b,
                        jnp.tile(jnp.arange(S, dtype=jnp.int32)[None, :], (B, 1)),
                        jnp.int32(-1))
    num_pos = jnp.sum((y_true > 0).astype(jnp.float32), axis=-1)
    num_item = jnp.sum(valid_b.astype(jnp.float32), axis=-1)
    ideal_dcg = jnp.array([6.0, 7.5], dtype=jnp.float32)

    state = init_state()
    loss, new_state = ndcg_m_forward(state, y_pred, y_true, qid, indices,
                                     num_pos, num_item, ideal_dcg)
    jax.block_until_ready((loss, new_state))
    print("KERNEL_OK")
</pallas_src>

<mosaic_0001>
module attributes {stable_mosaic.version = 11 : i64} {
  func.func @_ndcg_m_kernel(%arg0: memref<8x128xf32, #tpu.memory_space<vmem>>, %arg1: memref<8x128xf32, #tpu.memory_space<vmem>>) attributes {dimension_semantics = [], scalar_prefetch = 0 : i64, scratch_operands = 0 : i64, tpu.core_type = #tpu.core_type<tc>} {
    %c0 = arith.constant 0 : index
    %c0_0 = arith.constant 0 : index
    %0 = vector.load %arg0[%c0, %c0_0] : memref<8x128xf32, #tpu.memory_space<vmem>>, vector<2x8xf32>
    %c0_1 = arith.constant 0 : index
    %c8 = arith.constant 8 : index
    %1 = vector.load %arg0[%c0_1, %c8] : memref<8x128xf32, #tpu.memory_space<vmem>>, vector<2x8xf32>
    %c0_2 = arith.constant 0 : index
    %c16 = arith.constant 16 : index
    %2 = vector.load %arg0[%c0_2, %c16] : memref<8x128xf32, #tpu.memory_space<vmem>>, vector<2x8xf32>
    %c0_3 = arith.constant 0 : index
    %c24 = arith.constant 24 : index
    %3 = vector.load %arg0[%c0_3, %c24] : memref<8x128xf32, #tpu.memory_space<vmem>>, vector<2x1xf32>
    %c0_4 = arith.constant 0 : index
    %c25 = arith.constant 25 : index
    %4 = vector.load %arg0[%c0_4, %c25] : memref<8x128xf32, #tpu.memory_space<vmem>>, vector<2x1xf32>
    %c0_5 = arith.constant 0 : index
    %c26 = arith.constant 26 : index
    %5 = vector.load %arg0[%c0_5, %c26] : memref<8x128xf32, #tpu.memory_space<vmem>>, vector<2x1xf32>
    %c2 = arith.constant 2 : index
    %c0_6 = arith.constant 0 : index
    %6 = vector.load %arg0[%c2, %c0_6] : memref<8x128xf32, #tpu.memory_space<vmem>>, vector<4x10xf32>
    %c6 = arith.constant 6 : index
    %c0_7 = arith.constant 0 : index
    %7 = vector.load %arg0[%c6, %c0_7] : memref<8x128xf32, #tpu.memory_space<vmem>>, vector<1x4xf32>
    %c6_8 = arith.constant 6 : index
    %c4 = arith.constant 4 : index
    %8 = vector.load %arg0[%c6_8, %c4] : memref<8x128xf32, #tpu.memory_space<vmem>>, vector<1x4xf32>
    %c6_9 = arith.constant 6 : index
    %c8_10 = arith.constant 8 : index
    %9 = vector.load %arg0[%c6_9, %c8_10] : memref<8x128xf32, #tpu.memory_space<vmem>>, vector<1x4xf32>
    %cst = arith.constant -1.000000e+00 : f32
    %10 = vector.broadcast %cst : f32 to vector<2x8xf32>
    %11 = arith.cmpf one, %1, %10 : vector<2x8xf32>
    %12 = arith.extui %11 : vector<2x8xi1> to vector<2x8xi32>
    %13 = arith.sitofp %12 : vector<2x8xi32> to vector<2x8xf32>
    %cst_11 = arith.constant dense<0.000000e+00> : vector<2xf32>
    %14 = vector.multi_reduction <add>, %13, %cst_11 [1] : vector<2x8xf32> to vector<2xf32>
    %15 = vector.shape_cast %14 : vector<2xf32> to vector<2x1xf32>
    %cst_12 = arith.constant 1.000000e+00 : f32
    %16 = vector.broadcast %cst_12 : f32 to vector<2x1xf32>
    %17 = arith.maximumf %15, %16 : vector<2x1xf32>
    %cst_13 = arith.constant 1.000000e+00 : f32
    %18 = vector.broadcast %cst_13 : f32 to vector<2x1xf32>
    %19 = arith.divf %18, %17 : vector<2x1xf32>
    %20 = vector.shape_cast %0 : vector<2x8xf32> to vector<2x1x8xf32>
    %21 = vector.shape_cast %0 : vector<2x8xf32> to vector<2x8x1xf32>
    %22 = vector.broadcast %20 : vector<2x1x8xf32> to vector<2x8x8xf32>
    %23 = vector.broadcast %21 : vector<2x8x1xf32> to vector<2x8x8xf32>
    %24 = arith.subf %22, %23 : vector<2x8x8xf32>
    %25 = vector.shape_cast %13 : vector<2x8xf32> to vector<2x1x8xf32>
    %26 = vector.shape_cast %13 : vector<2x8xf32> to vector<2x8x1xf32>
    %27 = vector.broadcast %25 : vector<2x1x8xf32> to vector<2x8x8xf32>
    %28 = vector.broadcast %26 : vector<2x8x1xf32> to vector<2x8x8xf32>
    %29 = arith.mulf %27, %28 : vector<2x8x8xf32>
    %cst_14 = arith.constant 1.000000e+00 : f32
    %30 = vector.broadcast %cst_14 : f32 to vector<2x8x8xf32>
    %31 = arith.addf %24, %30 : vector<2x8x8xf32>
    %cst_15 = arith.constant 0.000000e+00 : f32
    %32 = vector.broadcast %cst_15 : f32 to vector<2x8x8xf32>
    %33 = arith.maximumf %31, %32 : vector<2x8x8xf32>
    %34 = arith.mulf %29, %33 : vector<2x8x8xf32>
    %35 = arith.mulf %34, %33 : vector<2x8x8xf32>
    %cst_16 = arith.constant dense<0.000000e+00> : vector<2x8xf32>
    %36 = vector.multi_reduction <add>, %35, %cst_16 [2] : vector<2x8x8xf32> to vector<2x8xf32>
    %37 = vector.broadcast %19 : vector<2x1xf32> to vector<2x8xf32>
    %38 = arith.mulf %36, %37 : vector<2x8xf32>
    %cst_17 = arith.constant 1.000000e-10 : f32
    %39 = vector.broadcast %cst_17 : f32 to vector<2x8xf32>
    %40 = arith.addf %38, %39 : vector<2x8xf32>
    %41 = tpu.iota {dimensions = array<i32: 1>} : vector<2x4xi32>
    %42 = arith.sitofp %41 : vector<2x4xi32> to vector<2x4xf32>
    %43 = vector.broadcast %3 : vector<2x1xf32> to vector<2x4xf32>
    %44 = arith.cmpf oeq, %42, %43 : vector<2x4xf32>
    %45 = arith.extui %44 : vector<2x4xi1> to vector<2x4xi32>
    %46 = arith.sitofp %45 : vector<2x4xi32> to vector<2x4xf32>
    %47 = vector.broadcast %7 : vector<1x4xf32> to vector<2x4xf32>
    %48 = arith.mulf %46, %47 : vector<2x4xf32>
    %cst_18 = arith.constant dense<0.000000e+00> : vector<2xf32>
    %49 = vector.multi_reduction <add>, %48, %cst_18 [1] : vector<2x4xf32> to vector<2xf32>
    %50 = vector.shape_cast %49 : vector<2xf32> to vector<2x1xf32>
    %51 = vector.broadcast %8 : vector<1x4xf32> to vector<2x4xf32>
    %52 = arith.mulf %46, %51 : vector<2x4xf32>
    %cst_19 = arith.constant dense<0.000000e+00> : vector<2xf32>
    %53 = vector.multi_reduction <add>, %52, %cst_19 [1] : vector<2x4xf32> to vector<2xf32>
    %54 = vector.shape_cast %53 : vector<2xf32> to vector<2x1xf32>
    %55 = vector.broadcast %9 : vector<1x4xf32> to vector<2x4xf32>
    %56 = arith.mulf %46, %55 : vector<2x4xf32>
    %cst_20 = arith.constant dense<0.000000e+00> : vector<2xf32>
    %57 = vector.multi_reduction <add>, %56, %cst_20 [1] : vector<2x4xf32> to vector<2xf32>
    %58 = vector.shape_cast %57 : vector<2xf32> to vector<2x1xf32>
    %59 = vector.shape_cast %46 : vector<2x4xf32> to vector<2x4x1xf32>
    %60 = vector.shape_cast %6 : vector<4x10xf32> to vector<1x4x10xf32>
    %61 = vector.broadcast %59 : vector<2x4x1xf32> to vector<2x4x10xf32>
    %62 = vector.broadcast %60 : vector<1x4x10xf32> to vector<2x4x10xf32>
    %63 = arith.mulf %61, %62 : vector<2x4x10xf32>
    %cst_21 = arith.constant dense<0.000000e+00> : vector<2x10xf32>
    %64 = vector.multi_reduction <add>, %63, %cst_21 [1] : vector<2x4x10xf32> to vector<2x10xf32>
    %65 = tpu.iota {dimensions = array<i32: 2>} : vector<2x8x10xi32>
    %66 = arith.sitofp %65 : vector<2x8x10xi32> to vector<2x8x10xf32>
    %67 = vector.shape_cast %2 : vector<2x8xf32> to vector<2x8x1xf32>
    %68 = vector.broadcast %67 : vector<2x8x1xf32> to vector<2x8x10xf32>
    %69 = arith.cmpf oeq, %66, %68 : vector<2x8x10xf32>
    %70 = arith.extui %69 : vector<2x8x10xi1> to vector<2x8x10xi32>
    %71 = arith.sitofp %70 : vector<2x8x10xi32> to vector<2x8x10xf32>
    %72 = vector.shape_cast %64 : vector<2x10xf32> to vector<2x1x10xf32>
    %73 = vector.broadcast %72 : vector<2x1x10xf32> to vector<2x8x10xf32>
    %74 = arith.mulf %71, %73 : vector<2x8x10xf32>
    %cst_22 = arith.constant dense<0.000000e+00> : vector<2x8xf32>
    %75 = vector.multi_reduction <add>, %74, %cst_22 [2] : vector<2x8x10xf32> to vector<2x8xf32>
    %cst_23 = arith.constant 0.899999976 : f32
    %76 = vector.broadcast %cst_23 : f32 to vector<2x8xf32>
    %77 = arith.mulf %76, %75 : vector<2x8xf32>
    %cst_24 = arith.constant 1.000000e-01 : f32
    %78 = vector.broadcast %cst_24 : f32 to vector<2x8xf32>
    %79 = arith.mulf %78, %40 : vector<2x8xf32>
    %80 = arith.addf %77, %79 : vector<2x8xf32>
    %cst_25 = arith.constant 0.000000e+00 : f32
    %81 = vector.broadcast %cst_25 : f32 to vector<2x8xf32>
    %82 = arith.maximumf %1, %81 : vector<2x8xf32>
    %cst_26 = arith.constant 0.693147182 : f32
    %83 = vector.broadcast %cst_26 : f32 to vector<2x8xf32>
    %84 = arith.mulf %82, %83 : vector<2x8xf32>
    %85 = math.exp %84 : vector<2x8xf32>
    %cst_27 = arith.constant 1.000000e+00 : f32
    %86 = vector.broadcast %cst_27 : f32 to vector<2x8xf32>
    %87 = arith.subf %85, %86 : vector<2x8xf32>
    %cst_28 = arith.constant 0.000000e+00 : f32
    %88 = vector.broadcast %cst_28 : f32 to vector<2x8xf32>
    %89 = arith.cmpf ogt, %13, %88 : vector<2x8xf32>
    %90 = vector.broadcast %50 : vector<2x1xf32> to vector<2x8xf32>
    %91 = arith.subf %0, %90 : vector<2x8xf32>
    %cst_29 = arith.constant 0.000000e+00 : f32
    %92 = vector.broadcast %cst_29 : f32 to vector<2x8xf32>
    %93 = arith.select %89, %91, %92 : vector<2x8xi1>, vector<2x8xf32>
    %cst_30 = arith.constant 1.000000e+03 : f32
    %94 = vector.broadcast %cst_30 : f32 to vector<2x8xf32>
    %95 = arith.mulf %93, %94 : vector<2x8xf32>
    %cst_31 = arith.constant 5.000000e-01 : f32
    %96 = vector.broadcast %cst_31 : f32 to vector<2x8xf32>
    %97 = arith.mulf %96, %95 : vector<2x8xf32>
    %98 = math.tanh %97 : vector<2x8xf32>
    %cst_32 = arith.constant 1.000000e+00 : f32
    %99 = vector.broadcast %cst_32 : f32 to vector<2x8xf32>
    %100 = arith.addf %98, %99 : vector<2x8xf32>
    %cst_33 = arith.constant 5.000000e-01 : f32
    %101 = vector.broadcast %cst_33 : f32 to vector<2x8xf32>
    %102 = arith.mulf %101, %100 : vector<2x8xf32>
    %cst_34 = arith.constant 2.000000e+00 : f32
    %103 = vector.broadcast %cst_34 : f32 to vector<2x8xf32>
    %104 = arith.mulf %93, %103 : vector<2x8xf32>
    %cst_35 = arith.constant 5.000000e-01 : f32
    %105 = vector.broadcast %cst_35 : f32 to vector<2x8xf32>
    %106 = arith.mulf %105, %104 : vector<2x8xf32>
    %107 = math.tanh %106 : vector<2x8xf32>
    %cst_36 = arith.constant 1.000000e+00 : f32
    %108 = vector.broadcast %cst_36 : f32 to vector<2x8xf32>
    %109 = arith.addf %107, %108 : vector<2x8xf32>
    %cst_37 = arith.constant 5.000000e-01 : f32
    %110 = vector.broadcast %cst_37 : f32 to vector<2x8xf32>
    %111 = arith.mulf %110, %109 : vector<2x8xf32>
    %cst_38 = arith.constant 3.000000e+00 : f32
    %112 = vector.broadcast %cst_38 : f32 to vector<2x1xf32>
    %113 = arith.divf %112, %4 : vector<2x1xf32>
    %cst_39 = arith.constant 9.99999974E-5 : f32
    %114 = vector.broadcast %cst_39 : f32 to vector<2x1xf32>
    %115 = arith.mulf %114, %50 : vector<2x1xf32>
    %116 = arith.addf %113, %115 : vector<2x1xf32>
    %117 = arith.mulf %13, %102 : vector<2x8xf32>
    %cst_40 = arith.constant dense<0.000000e+00> : vector<2xf32>
    %118 = vector.multi_reduction <add>, %117, %cst_40 [1] : vector<2x8xf32> to vector<2xf32>
    %119 = vector.shape_cast %118 : vector<2xf32> to vector<2x1xf32>
    %120 = arith.mulf %119, %19 : vector<2x1xf32>
    %121 = arith.subf %116, %120 : vector<2x1xf32>
    %122 = vector.broadcast %4 : vector<2x1xf32> to vector<2x8xf32>
    %123 = arith.mulf %122, %80 : vector<2x8xf32>
    %cst_41 = arith.constant 2.000000e+00 : f32
    %124 = vector.broadcast %cst_41 : f32 to vector<2x8xf32>
    %125 = arith.addf %124, %123 : vector<2x8xf32>
    %126 = math.log %125 : vector<2x8xf32>
    %cst_42 = arith.constant 1.44269502 : f32
    %127 = vector.broadcast %cst_42 : f32 to vector<2x8xf32>
    %128 = arith.mulf %126, %127 : vector<2x8xf32>
    %cst_43 = arith.constant 1.000000e+00 : f32
    %129 = vector.broadcast %cst_43 : f32 to vector<2x8xf32>
    %130 = arith.divf %129, %128 : vector<2x8xf32>
    %131 = vector.broadcast %4 : vector<2x1xf32> to vector<2x8xf32>
    %132 = arith.mulf %87, %131 : vector<2x8xf32>
    %133 = arith.mulf %132, %130 : vector<2x8xf32>
    %134 = arith.mulf %133, %130 : vector<2x8xf32>
    %cst_44 = arith.constant 0.693147182 : f32
    %135 = vector.broadcast %cst_44 : f32 to vector<2x8xf32>
    %136 = arith.mulf %125, %135 : vector<2x8xf32>
    %137 = arith.divf %134, %136 : vector<2x8xf32>
    %cst_45 = arith.constant 2.000000e+00 : f32
    %138 = vector.broadcast %cst_45 : f32 to vector<2x8xf32>
    %139 = arith.mulf %138, %111 : vector<2x8xf32>
    %140 = arith.mulf %137, %139 : vector<2x8xf32>
    %cst_46 = arith.constant 2.000000e+00 : f32
    %141 = vector.broadcast %cst_46 : f32 to vector<2x8xf32>
    %142 = arith.mulf %141, %111 : vector<2x8xf32>
    %cst_47 = arith.constant 1.000000e+00 : f32
    %143 = vector.broadcast %cst_47 : f32 to vector<2x8xf32>
    %144 = arith.subf %143, %111 : vector<2x8xf32>
    %145 = arith.mulf %142, %144 : vector<2x8xf32>
    %146 = arith.mulf %0, %13 : vector<2x8xf32>
    %cst_48 = arith.constant 1.000000e+00 : f32
    %147 = vector.broadcast %cst_48 : f32 to vector<2x8xf32>
    %148 = arith.subf %147, %102 : vector<2x8xf32>
    %149 = arith.mulf %102, %148 : vector<2x8xf32>
    %cst_49 = arith.constant 1.000000e+03 : f32
    %150 = vector.broadcast %cst_49 : f32 to vector<2x8xf32>
    %151 = arith.mulf %149, %150 : vector<2x8xf32>
    %152 = arith.mulf %13, %151 : vector<2x8xf32>
    %cst_50 = arith.constant dense<0.000000e+00> : vector<2xf32>
    %153 = vector.multi_reduction <add>, %152, %cst_50 [1] : vector<2x8xf32> to vector<2xf32>
    %154 = vector.shape_cast %153 : vector<2xf32> to vector<2x1xf32>
    %155 = arith.mulf %154, %19 : vector<2x1xf32>
    %cst_51 = arith.constant 9.99999974E-5 : f32
    %156 = vector.broadcast %cst_51 : f32 to vector<2x1xf32>
    %157 = arith.addf %156, %155 : vector<2x1xf32>
    %cst_52 = arith.constant 0.899999976 : f32
    %158 = vector.broadcast %cst_52 : f32 to vector<2x1xf32>
    %159 = arith.mulf %158, %157 : vector<2x1xf32>
    %cst_53 = arith.constant 1.000000e-01 : f32
    %160 = vector.broadcast %cst_53 : f32 to vector<2x1xf32>
    %161 = arith.mulf %160, %58 : vector<2x1xf32>
    %162 = arith.addf %159, %161 : vector<2x1xf32>
    %163 = arith.mulf %13, %151 : vector<2x8xf32>
    %164 = arith.mulf %163, %146 : vector<2x8xf32>
    %cst_54 = arith.constant dense<0.000000e+00> : vector<2xf32>
    %165 = vector.multi_reduction <add>, %164, %cst_54 [1] : vector<2x8xf32> to vector<2xf32>
    %166 = vector.shape_cast %165 : vector<2xf32> to vector<2x1xf32>
    %167 = arith.mulf %166, %19 : vector<2x1xf32>
    %168 = arith.divf %167, %162 : vector<2x1xf32>
    %cst_55 = arith.constant 0.000000e+00 : f32
    %169 = vector.broadcast %cst_55 : f32 to vector<2x8xf32>
    %170 = arith.subf %169, %87 : vector<2x8xf32>
    %171 = arith.mulf %170, %130 : vector<2x8xf32>
    %172 = arith.mulf %140, %40 : vector<2x8xf32>
    %173 = arith.mulf %145, %171 : vector<2x8xf32>
    %174 = vector.broadcast %168 : vector<2x1xf32> to vector<2x8xf32>
    %175 = arith.subf %146, %174 : vector<2x8xf32>
    %176 = arith.mulf %173, %175 : vector<2x8xf32>
    %177 = arith.addf %172, %176 : vector<2x8xf32>
    %cst_56 = arith.constant dense<0.000000e+00> : vector<2xf32>
    %178 = vector.multi_reduction <add>, %177, %cst_56 [1] : vector<2x8xf32> to vector<2xf32>
    %179 = vector.shape_cast %178 : vector<2xf32> to vector<2x1xf32>
    %cst_57 = arith.constant 8.000000e+00 : f32
    %180 = vector.broadcast %cst_57 : f32 to vector<2x1xf32>
    %181 = arith.divf %179, %180 : vector<2x1xf32>
    %182 = vector.shape_cast %5 : vector<2x1xf32> to vector<1x2x1xf32>
    %cst_58 = arith.constant dense<0.000000e+00> : vector<1xf32>
    %183 = vector.multi_reduction <add>, %182, %cst_58 [1, 2] : vector<1x2x1xf32> to vector<1xf32>
    %184 = vector.shape_cast %183 : vector<1xf32> to vector<1x1x1xf32>
    %185 = vector.extract %184[0, 0, 0] : f32 from vector<1x1x1xf32>
    %186 = vector.broadcast %185 : f32 to vector<1x1xf32>
    %cst_59 = arith.constant 2.000000e+00 : f32
    %187 = vector.broadcast %cst_59 : f32 to vector<1x1xf32>
    %188 = arith.divf %186, %187 : vector<1x1xf32>
    %189 = vector.shape_cast %181 : vector<2x1xf32> to vector<1x2x1xf32>
    %cst_60 = arith.constant dense<0.000000e+00> : vector<1xf32>
    %190 = vector.multi_reduction <add>, %189, %cst_60 [1, 2] : vector<1x2x1xf32> to vector<1xf32>
    %191 = vector.shape_cast %190 : vector<1xf32> to vector<1x1x1xf32>
    %192 = vector.extract %191[0, 0, 0] : f32 from vector<1x1x1xf32>
    %193 = vector.broadcast %192 : f32 to vector<1x1xf32>
    %cst_61 = arith.constant 2.000000e+00 : f32
    %194 = vector.broadcast %cst_61 : f32 to vector<1x1xf32>
    %195 = arith.divf %193, %194 : vector<1x1xf32>
    %196 = arith.mulf %188, %195 : vector<1x1xf32>
    %cst_62 = arith.constant 0.899999976 : f32
    %197 = vector.broadcast %cst_62 : f32 to vector<2x1xf32>
    %198 = arith.mulf %197, %121 : vector<2x1xf32>
    %cst_63 = arith.constant 1.000000e-01 : f32
    %199 = vector.broadcast %cst_63 : f32 to vector<2x1xf32>
    %200 = arith.mulf %199, %54 : vector<2x1xf32>
    %201 = arith.addf %198, %200 : vector<2x1xf32>
    %cst_64 = arith.constant 0.00999999977 : f32
    %202 = vector.broadcast %cst_64 : f32 to vector<2x1xf32>
    %203 = arith.mulf %202, %201 : vector<2x1xf32>
    %204 = arith.subf %50, %203 : vector<2x1xf32>
    %205 = vector.shape_cast %80 : vector<2x8xf32> to vector<2x8x1xf32>
    %206 = vector.broadcast %205 : vector<2x8x1xf32> to vector<2x8x10xf32>
    %207 = arith.mulf %71, %206 : vector<2x8x10xf32>
    %cst_65 = arith.constant dense<0.000000e+00> : vector<2x10xf32>
    %208 = vector.multi_reduction <add>, %207, %cst_65 [1] : vector<2x8x10xf32> to vector<2x10xf32>
    %cst_66 = arith.constant dense<0.000000e+00> : vector<2x10xf32>
    %209 = vector.multi_reduction <add>, %71, %cst_66 [1] : vector<2x8x10xf32> to vector<2x10xf32>
    %cst_67 = arith.constant 1.000000e+00 : f32
    %210 = vector.broadcast %cst_67 : f32 to vector<2x10xf32>
    %211 = arith.maximumf %209, %210 : vector<2x10xf32>
    %212 = arith.divf %208, %211 : vector<2x10xf32>
    %213 = tpu.iota {dimensions = array<i32: 0>} : vector<4x1xi32>
    %214 = arith.sitofp %213 : vector<4x1xi32> to vector<4x1xf32>
    %215 = tpu.iota {dimensions = array<i32: 1>} : vector<1x4xi32>
    %216 = arith.sitofp %215 : vector<1x4xi32> to vector<1x4xf32>
    %217 = vector.extract_strided_slice %3 {offsets = [0, 0], sizes = [1, 1], strides = [1, 1]} : vector<2x1xf32> to vector<1x1xf32>
    %218 = vector.broadcast %217 : vector<1x1xf32> to vector<4x1xf32>
    %219 = arith.cmpf oeq, %214, %218 : vector<4x1xf32>
    %220 = vector.extract_strided_slice %209 {offsets = [0, 0], sizes = [1, 10], strides = [1, 1]} : vector<2x10xf32> to vector<1x10xf32>
    %cst_68 = arith.constant 0.000000e+00 : f32
    %221 = vector.broadcast %cst_68 : f32 to vector<1x10xf32>
    %222 = arith.cmpf ogt, %220, %221 : vector<1x10xf32>
    %223 = vector.broadcast %219 : vector<4x1xi1> to vector<4x10xi1>
    %224 = vector.broadcast %222 : vector<1x10xi1> to vector<4x10xi1>
    %225 = arith.andi %223, %224 : vector<4x10xi1>
    %226 = vector.extract_strided_slice %212 {offsets = [0, 0], sizes = [1, 10], strides = [1, 1]} : vector<2x10xf32> to vector<1x10xf32>
    %227 = vector.shape_cast %226 : vector<1x10xf32> to vector<1x10xf32>
    %228 = vector.broadcast %227 : vector<1x10xf32> to vector<4x10xf32>
    %229 = arith.select %225, %228, %6 : vector<4x10xi1>, vector<4x10xf32>
    %230 = vector.broadcast %217 : vector<1x1xf32> to vector<1x4xf32>
    %231 = arith.cmpf oeq, %216, %230 : vector<1x4xf32>
    %232 = vector.extract_strided_slice %204 {offsets = [0, 0], sizes = [1, 1], strides = [1, 1]} : vector<2x1xf32> to vector<1x1xf32>
    %233 = vector.shape_cast %232 : vector<1x1xf32> to vector<1x1xf32>
    %234 = vector.broadcast %233 : vector<1x1xf32> to vector<1x4xf32>
    %235 = arith.select %231, %234, %7 : vector<1x4xi1>, vector<1x4xf32>
    %236 = vector.extract_strided_slice %201 {offsets = [0, 0], sizes = [1, 1], strides = [1, 1]} : vector<2x1xf32> to vector<1x1xf32>
    %237 = vector.shape_cast %236 : vector<1x1xf32> to vector<1x1xf32>
    %238 = vector.broadcast %237 : vector<1x1xf32> to vector<1x4xf32>
    %239 = arith.select %231, %238, %8 : vector<1x4xi1>, vector<1x4xf32>
    %240 = vector.extract_strided_slice %162 {offsets = [0, 0], sizes = [1, 1], strides = [1, 1]} : vector<2x1xf32> to vector<1x1xf32>
    %241 = vector.shape_cast %240 : vector<1x1xf32> to vector<1x1xf32>
    %242 = vector.broadcast %241 : vector<1x1xf32> to vector<1x4xf32>
    %243 = arith.select %231, %242, %9 : vector<1x4xi1>, vector<1x4xf32>
    %244 = vector.extract_strided_slice %3 {offsets = [1, 0], sizes = [1, 1], strides = [1, 1]} : vector<2x1xf32> to vector<1x1xf32>
    %245 = vector.broadcast %244 : vector<1x1xf32> to vector<4x1xf32>
    %246 = arith.cmpf oeq, %214, %245 : vector<4x1xf32>
    %247 = vector.extract_strided_slice %209 {offsets = [1, 0], sizes = [1, 10], strides = [1, 1]} : vector<2x10xf32> to vector<1x10xf32>
    %cst_69 = arith.constant 0.000000e+00 : f32
    %248 = vector.broadcast %cst_69 : f32 to vector<1x10xf32>
    %249 = arith.cmpf ogt, %247, %248 : vector<1x10xf32>
    %250 = vector.broadcast %246 : vector<4x1xi1> to vector<4x10xi1>
    %251 = vector.broadcast %249 : vector<1x10xi1> to vector<4x10xi1>
    %252 = arith.andi %250, %251 : vector<4x10xi1>
    %253 = vector.extract_strided_slice %212 {offsets = [1, 0], sizes = [1, 10], strides = [1, 1]} : vector<2x10xf32> to vector<1x10xf32>
    %254 = vector.shape_cast %253 : vector<1x10xf32> to vector<1x10xf32>
    %255 = vector.broadcast %254 : vector<1x10xf32> to vector<4x10xf32>
    %256 = arith.select %252, %255, %229 : vector<4x10xi1>, vector<4x10xf32>
    %257 = vector.broadcast %244 : vector<1x1xf32> to vector<1x4xf32>
    %258 = arith.cmpf oeq, %216, %257 : vector<1x4xf32>
    %259 = vector.extract_strided_slice %204 {offsets = [1, 0], sizes = [1, 1], strides = [1, 1]} : vector<2x1xf32> to vector<1x1xf32>
    %260 = vector.shape_cast %259 : vector<1x1xf32> to vector<1x1xf32>
    %261 = vector.broadcast %260 : vector<1x1xf32> to vector<1x4xf32>
    %262 = arith.select %258, %261, %235 : vector<1x4xi1>, vector<1x4xf32>
    %263 = vector.extract_strided_slice %201 {offsets = [1, 0], sizes = [1, 1], strides = [1, 1]} : vector<2x1xf32> to vector<1x1xf32>
    %264 = vector.shape_cast %263 : vector<1x1xf32> to vector<1x1xf32>
    %265 = vector.broadcast %264 : vector<1x1xf32> to vector<1x4xf32>
    %266 = arith.select %258, %265, %239 : vector<1x4xi1>, vector<1x4xf32>
    %267 = vector.extract_strided_slice %162 {offsets = [1, 0], sizes = [1, 1], strides = [1, 1]} : vector<2x1xf32> to vector<1x1xf32>
    %268 = vector.shape_cast %267 : vector<1x1xf32> to vector<1x1xf32>
    %269 = vector.broadcast %268 : vector<1x1xf32> to vector<1x4xf32>
    %270 = arith.select %258, %269, %243 : vector<1x4xi1>, vector<1x4xf32>
    %cst_70 = arith.constant 0.000000e+00 : f32
    %271 = vector.broadcast %cst_70 : f32 to vector<8x128xf32>
    %c0_71 = arith.constant 0 : index
    %c0_72 = arith.constant 0 : index
    %272 = vector.load %arg1[%c0_71, %c0_72] : memref<8x128xf32, #tpu.memory_space<vmem>>, vector<8x128xf32>
    tpu.vector_store %arg1[%c0_71, %c0_72], %271 {strides = array<i32>} : memref<8x128xf32, #tpu.memory_space<vmem>>, vector<8x128xf32>,
    %c0_73 = arith.constant 0 : index
    %c0_74 = arith.constant 0 : index
    %273 = vector.load %arg1[%c0_73, %c0_74] : memref<8x128xf32, #tpu.memory_space<vmem>>, vector<1x1xf32>
    tpu.vector_store %arg1[%c0_73, %c0_74], %196 {strides = array<i32>} : memref<8x128xf32, #tpu.memory_space<vmem>>, vector<1x1xf32>,
    %c1 = arith.constant 1 : index
    %c0_75 = arith.constant 0 : index
    %274 = vector.load %arg1[%c1, %c0_75] : memref<8x128xf32, #tpu.memory_space<vmem>>, vector<4x10xf32>
    tpu.vector_store %arg1[%c1, %c0_75], %256 {strides = array<i32>} : memref<8x128xf32, #tpu.memory_space<vmem>>, vector<4x10xf32>,
    %c5 = arith.constant 5 : index
    %c0_76 = arith.constant 0 : index
    %275 = vector.load %arg1[%c5, %c0_76] : memref<8x128xf32, #tpu.memory_space<vmem>>, vector<1x4xf32>
    tpu.vector_store %arg1[%c5, %c0_76], %262 {strides = array<i32>} : memref<8x128xf32, #tpu.memory_space<vmem>>, vector<1x4xf32>,
    %c5_77 = arith.constant 5 : index
    %c4_78 = arith.constant 4 : index
    %276 = vector.load %arg1[%c5_77, %c4_78] : memref<8x128xf32, #tpu.memory_space<vmem>>, vector<1x4xf32>
    tpu.vector_store %arg1[%c5_77, %c4_78], %266 {strides = array<i32>} : memref<8x128xf32, #tpu.memory_space<vmem>>, vector<1x4xf32>,
    %c5_79 = arith.constant 5 : index
    %c8_80 = arith.constant 8 : index
    %277 = vector.load %arg1[%c5_79, %c8_80] : memref<8x128xf32, #tpu.memory_space<vmem>>, vector<1x4xf32>
    tpu.vector_store %arg1[%c5_79, %c8_80], %270 {strides = array<i32>} : memref<8x128xf32, #tpu.memory_space<vmem>>, vector<1x4xf32>,
    return
  }
}

</mosaic_0001>

<llo_original>
// kernel: ndcg_m_forward.1
$region0: #{ndcg_m_forward.1}
  #allocation0 [shape = 'u32[]', space=smem, size = 0x4, offset = 0x4, fixed_abs, tag = 'smem constant byte address 0x4 - core index']
  #allocation1 [shape = 'u32[144,128]{1,0:T(1,128)}', space=vmem, size = 0x12000, scoped, tag = 'internal scratch']
  %s0 = inlined_call_operand.vmem [shape: f32[8,128], index: 0, kind: input, shape index: {}]
  %s1 = inlined_call_operand.vmem [shape: f32[8,128], index: 1, kind: output, shape index: {}]
  %s2 = sld [smem:[#allocation0]]
  $region14: #{ndcg_m_forward.1} parent=0
    _
  %s4 = ssub.s32 1, %s2
  %s5 = scalar_select 0, %s4, %s2
  // Predicated region
  $region2: #{ndcg_m_forward.1} parent=0 // pred_check
    _
  $region3: #{ndcg_m_forward.1} parent=0 // pred_check_branch
    %7 = sbr.rel (0) target = $region5
  $region4: #{ndcg_m_forward.1} parent=0 // pred_region
    _
  $region5: #{ndcg_m_forward.1} parent=0 // pred_fallthru
    _
  %v8 = vld [vmem:[%s0] sm:$0x3]
  %v9 = vld [vmem:[%s0 + $0x2] sm:$0xf]
  %v10 = vld [vmem:[%s0 + $0x6] sm:$0x1]
  %vm11 = vcmp.ne.f32.partialorder %v8, -1.0
  %v12 = vsel %vm11, 1, 0
  %v13 = vcvt.s32.f32 %v12
  %15 = vrot.lane.b32.xlu0 %v13, 120
  %v16 = vpop.permute.xlu0 %15
  %vm18 = vcmask 58368
  %v19 = vsel %vm18, %v16, 0.0
  %20 = vadd.xlane.f32.xlu0 %v19
  %v21 = vpop.xlane.xlu0 %20
  %v22 = vmax.f32 %v21, 1.0
  %v23 = vrcp.pop %v22
  %v24 = vmul.f32 1.0, %v23
  %v27 = vunpack.c.l.s4 1966171168
  %v28 = vunpack.c.0.s8 %v27
  %v29 = vlaneseq
  %v30 = vshrl.u32 %v29, 7
  %v31 = vsub.s32 %v28, %v30
  %v32 = vrot.slane %v8, %v31
  %v33 = vcombine.high %v32, %v32
  %v35 = vunpack.c.l.s4 1966171168
  %v36 = vunpack.c.0.s8 %v35
  %v37 = vlaneseq
  %v38 = vshrl.u32 %v37, 7
  %v39 = vsub.s32 %v36, %v38
  %v40 = vrot.slane %v32, %v39
  %v42 = vunpack.c.l.s4 1966171168
  %v43 = vunpack.c.0.s8 %v42
  %v44 = vlaneseq
  %v45 = vshrl.u32 %v44, 7
  %v46 = vsub.s32 %v43, %v45
  %v47 = vrot.slane %v33, %v46
  %v48 = vlaneseq
  %v49 = vshrl.u32 %v48, 7
  %v50 = vsub.s32 0, %v49
  %v51 = vrot.slane %v8, %v50
  %53 = vbcast.lane.b32.xlu0 %v51, 256
  %v54 = vpop.permute.xlu0 %53
  %v55 = vlaneseq
  %v56 = vshrl.u32 %v55, 7
  %v57 = vsub.s32 1, %v56
  %v58 = vrot.slane %v8, %v57
  %60 = vbcast.lane.b32.xlu0 %v58, 256
  %v61 = vpop.permute.xlu0 %60
  %v62 = vlaneseq
  %v63 = vshrl.u32 %v62, 7
  %v64 = vsub.s32 0, %v63
  %v65 = vrot.slane %v40, %v64
  %v66 = vlaneseq
  %v67 = vshrl.u32 %v66, 7
  %v68 = vsub.s32 0, %v67
  %v69 = vrot.slane %v47, %v68
  %v72 = vsub.f32 %v65, %v54
  %v73 = vsub.f32 %v69, %v61
  %v75 = vunpack.c.l.s4 1966171168
  %v76 = vunpack.c.0.s8 %v75
  %v77 = vlaneseq
  %v78 = vshrl.u32 %v77, 7
  %v79 = vsub.s32 %v76, %v78
  %v80 = vrot.slane %v13, %v79
  %v81 = vcombine.high %v80, %v80
  %v83 = vunpack.c.l.s4 1966171168
  %v84 = vunpack.c.0.s8 %v83
  %v85 = vlaneseq
  %v86 = vshrl.u32 %v85, 7
  %v87 = vsub.s32 %v84, %v86
  %v88 = vrot.slane %v80, %v87
  %v90 = vunpack.c.l.s4 1966171168
  %v91 = vunpack.c.0.s8 %v90
  %v92 = vlaneseq
  %v93 = vshrl.u32 %v92, 7
  %v94 = vsub.s32 %v91, %v93
  %v95 = vrot.slane %v81, %v94
  %v96 = vlaneseq
  %v97 = vshrl.u32 %v96, 7
  %v98 = vsub.s32 0, %v97
  %v99 = vrot.slane %v13, %v98
  %s101 = sor.u32 256, 8
  %102 = vbcast.lane.b32.xlu0 %v99, %s101
  %v103 = vpop.permute.xlu0 %102
  %v104 = vlaneseq
  %v105 = vshrl.u32 %v104, 7
  %v106 = vsub.s32 1, %v105
  %v107 = vrot.slane %v13, %v106
  %s109 = sor.u32 256, 8
  %110 = vbcast.lane.b32.xlu0 %v107, %s109
  %v111 = vpop.permute.xlu0 %110
  %v112 = vlaneseq
  %v113 = vshrl.u32 %v112, 7
  %v114 = vsub.s32 0, %v113
  %v115 = vrot.slane %v88, %v114
  %v116 = vlaneseq
  %v117 = vshrl.u32 %v116, 7
  %v118 = vsub.s32 0, %v117
  %v119 = vrot.slane %v95, %v118
  %v122 = vmul.f32 %v115, %v103
  %v123 = vmul.f32 %v119, %v111
  %v124 = vadd.f32 %v72, 1.0
  %v125 = vadd.f32 %v73, 1.0
  %v126 = vmax.f32 %v124, 0.0
  %v127 = vmax.f32 %v125, 0.0
  %130 = vrot.lane.b32.xlu0 %v126, 8
  %v131 = vpop.permute.xlu0 %130
  %132 = vrot.lane.b32.xlu0 %v127, 8
  %v133 = vpop.permute.xlu0 %132
  %v136 = vmul.f32 %v122, %v131
  %v137 = vmul.f32 %v123, %v133
  %v138 = vmul.f32 %v136, %v131
  %v139 = vmul.f32 %v137, %v133
  %142 = vrot.lane.b32.xlu0 %v138, 120
  %v143 = vpop.permute.xlu0 %142
  %144 = vrot.lane.b32.xlu0 %v139, 120
  %v145 = vpop.permute.xlu0 %144
  %vm148 = vcmask 64512
  %v149 = vsel %vm148, %v143, 0.0
  %150 = vadd.xlane.f32.xlu0 %v149
  %v151 = vpop.xlane.xlu0 %150
  %v152 = vsel %vm148, %v145, 0.0
  %153 = vadd.xlane.f32.xlu0 %v152
  %v154 = vpop.xlane.xlu0 %153
  %v156 = vlaneseq
  %v157 = vshrl.u32 %v156, 7
  %v158 = vsub.s32 0, %v157
  %v159 = vrot.slane %v24, %v158
  %v160 = vlaneseq
  %v161 = vshrl.u32 %v160, 7
  %v162 = vsub.s32 1, %v161
  %v163 = vrot.slane %v24, %v162
  %v166 = vmul.f32 %v151, %v159
  %v167 = vmul.f32 %v154, %v163
  %v168 = vadd.f32 %v166, 1e-10
  %v169 = vadd.f32 %v167, 1e-10
  %v170 = vlaneseq
  %v171 = vand.u32 %v170, 127
  %v172 = vcvt.s32.f32 %v171
  %173 = vset.pattern.permute.xlu0 24
  %174 = vperm.xlu0 %173, %v8
  %v175 = vpop.permute.xlu0 %174
  %vm177 = vcmp.eq.f32.partialorder %v172, %v175
  %v178 = vsel %vm177, 1, 0
  %v179 = vcvt.s32.f32 %v178
  %v180 = vlaneseq
  %v181 = vshrl.u32 %v180, 7
  %v182 = vsub.s32 0, %v181
  %v183 = vrot.slane %v10, %v182
  %v184 = vmul.f32 %v179, %v183
  %vm185 = vcmask 25600
  %v186 = vsel %vm185, %v184, 0.0
  %187 = vadd.xlane.f32.xlu0 %v186
  %v188 = vpop.xlane.xlu0 %187
  %190 = vrot.lane.b32.xlu0 %v183, 124
  %v191 = vpop.permute.xlu0 %190
  %v193 = vmul.f32 %v179, %v191
  %v194 = vsel %vm185, %v193, 0.0
  %195 = vadd.xlane.f32.xlu0 %v194
  %v196 = vpop.xlane.xlu0 %195
  %197 = vrot.lane.b32.xlu0 %v183, 120
  %v198 = vpop.permute.xlu0 %197
  %v200 = vmul.f32 %v179, %v198
  %v201 = vsel %vm185, %v200, 0.0
  %202 = vadd.xlane.f32.xlu0 %v201
  %v203 = vpop.xlane.xlu0 %202
  %v204 = vlaneseq
  %v205 = vshrl.u32 %v204, 7
  %v206 = vsub.s32 0, %v205
  %v207 = vrot.slane %v179, %v206
  %209 = vbcast.lane.b32.xlu0 %v207, 256
  %v210 = vpop.permute.xlu0 %209
  %v211 = vlaneseq
  %v212 = vshrl.u32 %v211, 7
  %v213 = vsub.s32 1, %v212
  %v214 = vrot.slane %v179, %v213
  %216 = vbcast.lane.b32.xlu0 %v214, 256
  %v217 = vpop.permute.xlu0 %216
  %v218 = vmul.f32 %v210, %v9
  %v219 = vmul.f32 %v217, %v9
  %vm220 = vcmask 76800
  %v221 = vsel %vm220, %v218, 0.0
  %v222 = vrot.slane %v221, 4
  %v223 = vadd.f32 %v221, %v222
  %v224 = vrot.slane %v223, 2
  %v225 = vadd.f32 %v223, %v224
  %v226 = vrot.slane %v225, 1
  %v227 = vadd.f32 %v225, %v226
  %v228 = vsel %vm220, %v219, 0.0
  %v229 = vrot.slane %v228, 4
  %v230 = vadd.f32 %v228, %v229
  %v231 = vrot.slane %v230, 2
  %v232 = vadd.f32 %v230, %v231
  %v233 = vrot.slane %v232, 1
  %v234 = vadd.f32 %v232, %v233
  %s236 = sor.u32 256, 16
  %237 = vbcast.lane.b32.xlu0 %v51, %s236
  %v238 = vpop.permute.xlu0 %237
  %s240 = sor.u32 256, 16
  %241 = vbcast.lane.b32.xlu0 %v58, %s240
  %v242 = vpop.permute.xlu0 %241
  %vm243 = vcmp.eq.f32.partialorder %v172, %v238
  %vm244 = vcmp.eq.f32.partialorder %v172, %v242
  %v245 = vsel %vm243, 1, 0
  %v246 = vsel %vm244, 1, 0
  %v247 = vcvt.s32.f32 %v245
  %v248 = vcvt.s32.f32 %v246
  %v249 = vmul.f32 %v247, %v227
  %v250 = vmul.f32 %v248, %v234
  %vm251 = vcmask 80896
  %v252 = vsel %vm251, %v249, 0.0
  %253 = vadd.xlane.f32.xlu0 %v252
  %v254 = vpop.xlane.xlu0 %253
  %v255 = vsel %vm251, %v250, 0.0
  %256 = vadd.xlane.f32.xlu0 %v255
  %v257 = vpop.xlane.xlu0 %256
  %v258 = vmul.f32 %v254, 0.9
  %v259 = vmul.f32 %v257, 0.9
  %v260 = vmul.f32 %v168, 0.1
  %v261 = vmul.f32 %v169, 0.1
  %v262 = vadd.f32 %v258, %v260
  %v263 = vadd.f32 %v259, %v261
  %v264 = vmax.f32 %v8, 0.0
  %v265 = vmul.f32 %v264, 0.6931472
  %v266 = vmul.f32 %v265, 1.442695
  %v267 = vpow.pop %v266
  %v268 = vsub.f32 %v267, 1.0
  %vm269 = vcmp.gt.f32.partialorder %v13, 0.0
  %v270 = vsub.f32 %v8, %v188
  %272 = vrot.lane.b32.xlu0 %v270, 8
  %v273 = vpop.permute.xlu0 %272
  %v275 = vsel %vm269, %v273, 0.0
  %v276 = vmul.f32 %v275, 1000.0
  %v277 = vmul.f32 %v276, 0.5
  %v278 = vtanh.pop %v277
  %v279 = vadd.f32 %v278, 1.0
  %v280 = vmul.f32 %v279, 0.5
  %v281 = vmul.f32 %v275, 2.0
  %v282 = vmul.f32 %v281, 0.5
  %v283 = vtanh.pop %v282
  %v284 = vadd.f32 %v283, 1.0
  %v285 = vmul.f32 %v284, 0.5
  %v286 = vrcp.pop %v8
  %v287 = vmul.f32 3.0, %v286
  %v288 = vmul.f32 %v188, 0.0001
  %v289 = vadd.f32 %v287, %v288
  %v290 = vmul.f32 %v13, %v280
  %292 = vrot.lane.b32.xlu0 %v290, 120
  %v293 = vpop.permute.xlu0 %292
  %v295 = vsel %vm18, %v293, 0.0
  %296 = vadd.xlane.f32.xlu0 %v295
  %v297 = vpop.xlane.xlu0 %296
  %v298 = vmul.f32 %v297, %v24
  %v299 = vsub.f32 %v289, %v298
  %300 = vset.pattern.permute.xlu0 25
  %301 = vperm.xlu0 %300, %v8
  %v302 = vpop.permute.xlu0 %301
  %306 = vset.pattern.permute.xlu0 0
  %307 = vperm.xlu0 %306, %v262
  %v308 = vpop.permute.xlu0 %307
  %309 = vset.pattern.permute.xlu0 0
  %310 = vperm.xlu0 %309, %v263
  %v311 = vpop.permute.xlu0 %310
  %v312 = vlaneseq
  %v313 = vshrl.u32 %v312, 7
  %v314 = vsub.s32 %v171, %v313
  %v315 = vrot.slane %v308, %v314
  %v316 = vlaneseq
  %v317 = vshrl.u32 %v316, 7
  %v318 = vsub.s32 %v171, %v317
  %v319 = vrot.slane %v311, %v318
  %vm320 = vcmask 1041409
  %v321 = vsel %vm320, %v319, %v315
  %v323 = vmul.f32 %v302, %v321
  %v324 = vadd.f32 %v323, 2.0
  %v325 = vlog2.pop %v324
  %v326 = vmul.f32 %v325, 0.6931472
  %v327 = vmul.f32 %v326, 1.442695
  %v328 = vrcp.pop %v327
  %v329 = vmul.f32 1.0, %v328
  %v330 = vmul.f32 %v268, %v302
  %332 = vrot.lane.b32.xlu0 %v329, 8
  %v333 = vpop.permute.xlu0 %332
  %v335 = vmul.f32 %v330, %v333
  %v336 = vmul.f32 %v335, %v333
  %v337 = vmul.f32 %v324, 0.6931472
  %339 = vrot.lane.b32.xlu0 %v337, 8
  %v340 = vpop.permute.xlu0 %339
  %v342 = vrcp.pop %v340
  %v343 = vmul.f32 %v336, %v342
  %v344 = vmul.f32 %v285, 2.0
  %v345 = vmul.f32 %v343, %v344
  %v346 = vsub.f32 1.0, %v285
  %v347 = vmul.f32 %v344, %v346
  %v348 = vmul.f32 %v8, %v16
  %v349 = vsub.f32 1.0, %v280
  %v350 = vmul.f32 %v280, %v349
  %v351 = vmul.f32 %v350, 1000.0
  %v352 = vmul.f32 %v13, %v351
  %354 = vrot.lane.b32.xlu0 %v352, 120
  %v355 = vpop.permute.xlu0 %354
  %v357 = vsel %vm18, %v355, 0.0
  %358 = vadd.xlane.f32.xlu0 %v357
  %v359 = vpop.xlane.xlu0 %358
  %v360 = vmul.f32 %v359, %v24
  %v361 = vadd.f32 %v360, 0.0001
  %v362 = vmul.f32 %v361, 0.9
  %v363 = vmul.f32 %v203, 0.1
  %v364 = vadd.f32 %v362, %v363
  %366 = vrot.lane.b32.xlu0 %v348, 8
  %v367 = vpop.permute.xlu0 %366
  %v369 = vmul.f32 %v352, %v367
  %371 = vrot.lane.b32.xlu0 %v369, 120
  %v372 = vpop.permute.xlu0 %371
  %v374 = vsel %vm18, %v372, 0.0
  %375 = vadd.xlane.f32.xlu0 %v374
  %v376 = vpop.xlane.xlu0 %375
  %v377 = vmul.f32 %v376, %v24
  %v378 = vrcp.pop %v364
  %v379 = vmul.f32 %v377, %v378
  %v380 = vsub.f32 0.0, %v268
  %v381 = vmul.f32 %v380, %v333
  %384 = vset.pattern.permute.xlu0 0
  %385 = vperm.xlu0 %384, %v168
  %v386 = vpop.permute.xlu0 %385
  %387 = vset.pattern.permute.xlu0 0
  %388 = vperm.xlu0 %387, %v169
  %v389 = vpop.permute.xlu0 %388
  %v390 = vadd.s32 %v171, 4294967288
  %v391 = vlaneseq
  %v392 = vshrl.u32 %v391, 7
  %v393 = vsub.s32 %v390, %v392
  %v394 = vrot.slane %v386, %v393
  %v395 = vlaneseq
  %v396 = vshrl.u32 %v395, 7
  %v397 = vsub.s32 %v390, %v396
  %v398 = vrot.slane %v389, %v397
  %v399 = vsel %vm320, %v398, %v394
  %v401 = vmul.f32 %v345, %v399
  %v402 = vmul.f32 %v347, %v381
  %v403 = vsub.f32 %v348, %v379
  %405 = vrot.lane.b32.xlu0 %v403, 8
  %v406 = vpop.permute.xlu0 %405
  %v408 = vmul.f32 %v402, %v406
  %v409 = vadd.f32 %v401, %v408
  %411 = vrot.lane.b32.xlu0 %v409, 120
  %v412 = vpop.permute.xlu0 %411
  %v414 = vsel %vm18, %v412, 0.0
  %415 = vadd.xlane.f32.xlu0 %v414
  %v416 = vpop.xlane.xlu0 %415
  %v417 = vrcp.pop 8.0
  %v418 = vmul.f32 %v416, %v417
  %419 = vrot.lane.b32.xlu0 %v8, 102
  %v420 = vpop.permute.xlu0 %419
  %vm422 = vcmask 1024
  %v423 = vsel %vm422, %v420, 0.0
  %424 = vadd.xlane.f32.xlu0 %v423
  %v425 = vpop.xlane.xlu0 %424
  %v426 = vrot.slane %v425, 4
  %v427 = vadd.f32 %v425, %v426
  %v428 = vrot.slane %v427, 2
  %v429 = vadd.f32 %v427, %v428
  %v430 = vrot.slane %v429, 1
  %v431 = vadd.f32 %v429, %v430
  %s432 = vtos %v431
  %v433 = vstv %s432
  %v434 = vrcp.pop 2.0
  %v435 = vmul.f32 %v433, %v434
  %v436 = vsel %vm422, %v418, 0.0
  %437 = vadd.xlane.f32.xlu0 %v436
  %v438 = vpop.xlane.xlu0 %437
  %v439 = vrot.slane %v438, 4
  %v440 = vadd.f32 %v438, %v439
  %v441 = vrot.slane %v440, 2
  %v442 = vadd.f32 %v440, %v441
  %v443 = vrot.slane %v442, 1
  %v444 = vadd.f32 %v442, %v443
  %s445 = vtos %v444
  %v446 = vstv %s445
  %v447 = vmul.f32 %v446, %v434
  %v448 = vmul.f32 %v435, %v447
  %v449 = vmul.f32 %v299, 0.9
  %v450 = vmul.f32 %v196, 0.1
  %v451 = vadd.f32 %v449, %v450
  %v452 = vmul.f32 %v451, 0.01
  %v453 = vsub.f32 %v188, %v452
  %v456 = vmul.f32 %v247, %v308
  %v457 = vmul.f32 %v248, %v311
  %v458 = vsel %vm251, %v456, 0.0
  %v459 = vrot.slane %v458, 4
  %v460 = vadd.f32 %v458, %v459
  %v461 = vrot.slane %v460, 2
  %v462 = vadd.f32 %v460, %v461
  %v463 = vrot.slane %v462, 1
  %v464 = vadd.f32 %v462, %v463
  %v465 = vsel %vm251, %v457, 0.0
  %v466 = vrot.slane %v465, 4
  %v467 = vadd.f32 %v465, %v466
  %v468 = vrot.slane %v467, 2
  %v469 = vadd.f32 %v467, %v468
  %v470 = vrot.slane %v469, 1
  %v471 = vadd.f32 %v469, %v470
  %v472 = vsel %vm251, %v247, 0.0
  %v473 = vrot.slane %v472, 4
  %v474 = vadd.f32 %v472, %v473
  %v475 = vrot.slane %v474, 2
  %v476 = vadd.f32 %v474, %v475
  %v477 = vrot.slane %v476, 1
  %v478 = vadd.f32 %v476, %v477
  %v479 = vsel %vm251, %v248, 0.0
  %v480 = vrot.slane %v479, 4
  %v481 = vadd.f32 %v479, %v480
  %v482 = vrot.slane %v481, 2
  %v483 = vadd.f32 %v481, %v482
  %v484 = vrot.slane %v483, 1
  %v485 = vadd.f32 %v483, %v484
  %v486 = vmax.f32 %v478, 1.0
  %v487 = vmax.f32 %v485, 1.0
  %v488 = vrcp.pop %v486
  %v489 = vmul.f32 %v464, %v488
  %v490 = vrcp.pop %v487
  %v491 = vmul.f32 %v471, %v490
  %v492 = vlaneseq
  %v493 = vshrl.u32 %v492, 7
  %v494 = vcvt.s32.f32 %v493
  %vm495 = vcmp.eq.f32.partialorder %v494, %v51
  %vm496 = vcmp.gt.f32.partialorder %v478, 0.0
  %v497 = vsel %vm495, 1, 0
  %498 = vset.pattern.permute.xlu0 24
  %499 = vperm.xlu0 %498, %v497
  %v500 = vpop.permute.xlu0 %499
  %vm501 = vcmp.eq.s32.totalorder %v500, 1
  %v502 = vsel %vm496, 1, 0
  %vm503 = vcmp.eq.s32.totalorder %v502, 1
  %vm504 = vmand %vm501, %vm503
  %v505 = vsel %vm504, %v489, %v9
  %507 = vset.pattern.permute.xlu0 25
  %508 = vperm.xlu0 %507, %v453
  %v509 = vpop.permute.xlu0 %508
  %v511 = vsel %vm177, %v509, %v10
  %513 = vset.pattern.permute.xlu0 25
  %514 = vperm.xlu0 %513, %v451
  %v515 = vpop.permute.xlu0 %514
  %518 = vrot.lane.b32.xlu0 %v10, 124
  %v519 = vpop.permute.xlu0 %518
  %v521 = vsel %vm177, %v515, %v519
  %522 = vrot.lane.b32.xlu0 %v10, 120
  %v523 = vpop.permute.xlu0 %522
  %v525 = vsel %vm177, %v364, %v523
  %vm526 = vcmp.eq.f32.partialorder %v494, %v58
  %vm527 = vcmp.gt.f32.partialorder %v485, 0.0
  %v528 = vsel %vm526, 1, 0
  %529 = vset.pattern.permute.xlu0 24
  %530 = vperm.xlu0 %529, %v528
  %v531 = vpop.permute.xlu0 %530
  %vm532 = vcmp.eq.s32.totalorder %v531, 1
  %v533 = vsel %vm527, 1, 0
  %vm534 = vcmp.eq.s32.totalorder %v533, 1
  %vm535 = vmand %vm532, %vm534
  %v536 = vsel %vm535, %v491, %v505
  %v538 = vrot.slane %v511, 7
  %v540 = vsel %vm177, %v509, %v538
  %v542 = vrot.slane %v521, 7
  %v544 = vsel %vm177, %v515, %v542
  %v546 = vrot.slane %v525, 7
  %v548 = vsel %vm177, %v364, %v546
  %549 = vst [vmem:[%s1] sm:$0xff] 0.0
  %vm550 = vcmask 0
  %551 = vst.msk [vmem:[%s1] sm:$0x1] %vm550, %v448
  %552 = vst.msk [vmem:[%s1 + $0x1] sm:$0xf] %vm220, %v536
  %vm553 = vcmask 25601
  %554 = vst.msk [vmem:[%s1 + $0x4] sm:$0x2] %vm553, %v540
  %556 = vrot.lane.b32.xlu0 %v544, 4
  %v557 = vpop.permute.xlu0 %556
  %vm559 = vcmask 58401
  %560 = vst.msk [vmem:[%s1 + $0x4] sm:$0x2] %vm559, %v557
  %562 = vrot.lane.b32.xlu0 %v548, 8
  %v563 = vpop.permute.xlu0 %562
  %vm565 = vcmask 91201
  %566 = vst.msk [vmem:[%s1 + $0x4] sm:$0x2] %vm565, %v563
  // Predicated region
  $region6: #{ndcg_m_forward.1} parent=0 // pred_check
    _
  $region7: #{ndcg_m_forward.1} parent=0 // pred_check_branch
    %568 = sbr.rel (0) target = $region9
  $region8: #{ndcg_m_forward.1} parent=0 // pred_region
    _
  $region9: #{ndcg_m_forward.1} parent=0 // pred_fallthru
    _
  // Predicated region
  $region10: #{ndcg_m_forward.1} parent=0 // pred_check
    _
  $region11: #{ndcg_m_forward.1} parent=0 // pred_check_branch
    %570 = sbr.rel (0) target = $region13
  $region12: #{ndcg_m_forward.1} parent=0 // pred_region
    _
  $region13: #{ndcg_m_forward.1} parent=0 // pred_fallthru
    _

</llo_original>
